<compile_context>
chip_gen: v7x
topology: tpu7x:2x2x1
jax: 0.10.0
libtpu: 0.0.40
codegen_flags: <defaults>
</compile_context>

<pallas_src>
import jax
import jax.numpy as jnp
from jax.experimental import pallas as pl
from jax.experimental.pallas import tpu as pltpu


def _stack_kernel(relu_ref, x_ref, w_ref, b_ref, o_ref, act_ref):
    """One (M-tile, layer) grid step of the fused MLP stack."""
    l = pl.program_id(1)
    n_l = pl.num_programs(1)

    # Load + cast the input activation tile into the resident bf16 VMEM
    # scratch on the first layer step (the x block index is constant across
    # l, so this block is DMA'd only once per M tile).
    @pl.when(l == 0)
    def _():
        act_ref[...] = x_ref[...].astype(act_ref.dtype)

    # y = act @ W[l] + b[l]   (bf16 MXU inputs, f32 accumulation)
    y = jnp.dot(act_ref[...], w_ref[...], preferred_element_type=jnp.float32)
    y = y + b_ref[...]                      # (1, D) broadcasts over rows

    # Optional relu, selected by the per-layer mask (SMEM scalar prefetch).
    # The select happens on a scalar; the tensor op is a single VPU max pass.
    do_relu = relu_ref[l] != 0
    relu_floor = jnp.where(do_relu, 0.0, -jnp.inf).astype(jnp.float32)
    y = jnp.maximum(y, relu_floor)

    # Intermediate layers: write back to the resident activation scratch.
    @pl.when(l < n_l - 1)
    def _():
        act_ref[...] = y.astype(act_ref.dtype)

    # Last layer: write the output tile.
    @pl.when(l == n_l - 1)
    def _():
        o_ref[...] = y.astype(o_ref.dtype)


def _default_tm():
    """Generation-tuned M tile: 512 on v5e (MXU-bound, small scoped VMEM),
    1024 on v6e/v7x (flips the kernel from HBM-bound to MXU-bound)."""
    try:
        kind = jax.devices()[0].device_kind.lower()
    except Exception:
        return 1024
    if "v5 lite" in kind or "v5e" in kind or "v5lite" in kind:
        return 512
    return 1024


def fused_mlp_stack(x, w_stack, b_stack, relu_mask, *, tm=None):
    """Run the whole Linear stack in one fused Pallas kernel.

    x:         (M, D)          activations (f32; cast to bf16 in-kernel)
    w_stack:   (L, D, D)       per-layer weights stored (in, out) so y = x@W+b
                               -- pass bf16 to avoid a per-call cast pass.
    b_stack:   (L, D)          per-layer biases (f32)
    relu_mask: (L,) int32      1 where relu follows the layer, else 0
    """
    M, D = x.shape
    L, Din, Dout = w_stack.shape
    assert D == Din == Dout
    assert relu_mask.shape == (L,)

    if tm is None:
        tm = _default_tm()
    tm = min(tm, M)
    if M % tm != 0:
        # TODO(synk): a masked last tile (pl.cdiv grid) would avoid shrinking;
        # fall back to the largest tile that divides M.
        t = tm
        while t > 8 and M % t != 0:
            t //= 2
        tm = t if M % t == 0 else M

    # Weights should already be bf16 (cast once at init); fall back if not.
    if w_stack.dtype != jnp.bfloat16:
        w_stack = w_stack.astype(jnp.bfloat16)
    b3 = b_stack.reshape(L, 1, D).astype(jnp.float32)
    relu_mask = relu_mask.astype(jnp.int32)

    out_dtype = x.dtype
    x_itemsize = jnp.dtype(x.dtype).itemsize
    out_itemsize = jnp.dtype(out_dtype).itemsize
    n_m_tiles = M // tm

    cost = pl.CostEstimate(
        flops=2 * M * D * D * L,
        transcendentals=0,
        bytes_accessed=(
            M * D * x_itemsize                       # x read once
            + n_m_tiles * L * D * D * 2              # weights re-streamed per M tile
            + n_m_tiles * L * D * 4                  # biases re-streamed per M tile
            + M * D * out_itemsize                   # output write
        ),
    )

    # VMEM budget (double-buffered BlockSpecs + scratch + f32 intermediate
    # headroom); raise the scoped limit above the v5e 16 MiB default but stay
    # well under v7x's 64 MiB physical per TC.
    vmem_need = (
        2 * tm * D * x_itemsize                      # x double buffer
        + 2 * tm * D * out_itemsize                  # out double buffer
        + 2 * (D * D * 2 + D * 4)                    # weight + bias double buffer
        + tm * D * 2                                 # bf16 act scratch
        + tm * D * 4                                 # f32 intermediate headroom
    )
    vmem_limit = int(min(max(vmem_need + (4 << 20), 32 << 20), 48 << 20))

    return pl.pallas_call(
        _stack_kernel,
        out_shape=jax.ShapeDtypeStruct((M, D), out_dtype),
        grid_spec=pltpu.PrefetchScalarGridSpec(
            num_scalar_prefetch=1,
            grid=(n_m_tiles, L),
            in_specs=[
                # activation input: constant block across the layer axis
                pl.BlockSpec((tm, D), lambda i, l, rm: (i, 0)),
                # per-layer weight slab, streamed over l; kernel sees (D, D)
                pl.BlockSpec((pl.Squeezed(), D, D), lambda i, l, rm: (l, 0, 0)),
                # per-layer bias row; kernel sees (1, D)
                pl.BlockSpec((pl.Squeezed(), 1, D), lambda i, l, rm: (l, 0, 0)),
            ],
            out_specs=pl.BlockSpec((tm, D), lambda i, l, rm: (i, 0)),
            # resident bf16 activation scratch (carried across layer steps)
            scratch_shapes=[pltpu.VMEM((tm, D), jnp.bfloat16)],
        ),
        compiler_params=pltpu.CompilerParams(
            dimension_semantics=("parallel", "arbitrary"),
            vmem_limit_bytes=vmem_limit,
        ),
        cost_estimate=cost,
    )(relu_mask, x, w_stack, b3)


def init_stacked_params(key, d_model, n_layers):
    """Xavier-uniform weights stacked as (L, in, out) and pre-cast to bf16
    (single, one-time cast so the per-forward hot path has none); zero biases;
    per-layer relu mask."""
    L = 2 + 4 * n_layers
    bound = (6.0 / (d_model + d_model)) ** 0.5
    w = jax.random.uniform(
        key, (L, d_model, d_model), minval=-bound, maxval=bound, dtype=jnp.float32
    ).astype(jnp.bfloat16)
    b = jnp.zeros((L, d_model), dtype=jnp.float32)
    # layer order: proj_in, [l1, l2(+relu), l3, l4(+relu)] * n_layers, proj_out
    relu_list = [0]
    for _ in range(n_layers):
        relu_list += [0, 1, 0, 1]
    relu_list += [0]
    relu_mask = jnp.asarray(relu_list, dtype=jnp.int32)
    return w, b, relu_mask, relu_list


def reference_forward(w_stack, b_stack, relu_list, x):
    """Pure-JAX reference using the same bf16-input / f32-accum arithmetic."""
    w_bf16 = w_stack.astype(jnp.bfloat16)
    act = x.astype(jnp.bfloat16)
    L = w_stack.shape[0]
    out = None
    for l in range(L):
        y = jnp.dot(act, w_bf16[l], preferred_element_type=jnp.float32)
        y = y + b_stack[l]
        if relu_list[l]:
            y = jnp.maximum(y, 0.0)
        if l < L - 1:
            act = y.astype(jnp.bfloat16)
        else:
            out = y.astype(x.dtype)
    return out


if __name__ == "__main__":
    # Small, shape-consistent config (production is bs=8192, d_model=1024,
    # n_layers=8 with tm auto-selected per generation; scaled down here but
    # still multi-block on both grid axes).
    bs = 512
    d_model = 256
    n_layers = 2

    key = jax.random.PRNGKey(0)
    k_params, k_x = jax.random.split(key)

    w_stack, b_stack, relu_mask, relu_list = init_stacked_params(
        k_params, d_model, n_layers
    )
    x = jax.random.normal(k_x, (bs, d_model), dtype=jnp.float32)

    out = fused_mlp_stack(x, w_stack, b_stack, relu_mask, tm=128)
    out = jax.block_until_ready(out)

    ref = reference_forward(w_stack, b_stack, relu_list, x)
    assert out.shape == (bs, d_model)
    assert jnp.allclose(out, ref, atol=2e-2, rtol=2e-2), float(
        jnp.max(jnp.abs(out - ref))
    )

    # TODO(synk): 'ckpt'/'nano'/'nano2' modes only change autograd/memory
    # behavior (checkpoint + batch chunking); forward math is identical, so no
    # separate kernel path is needed.
    print("KERNEL_OK")
</pallas_src>

<mosaic_0001>
module attributes {stable_mosaic.version = 11 : i64} {
  func.func @_stack_kernel(%arg0: i32, %arg1: i32, %arg2: memref<10xi32, #tpu.memory_space<smem>>, %arg3: memref<128x256xf32, #tpu.memory_space<vmem>>, %arg4: memref<1x256x256xbf16, #tpu.memory_space<vmem>>, %arg5: memref<1x1x256xf32, #tpu.memory_space<vmem>>, %arg6: memref<128x256xf32, #tpu.memory_space<vmem>>, %arg7: memref<128x256xbf16, #tpu.memory_space<vmem>>) attributes {dimension_semantics = [#tpu.dimension_semantics<parallel>, #tpu.dimension_semantics<arbitrary>], iteration_bounds = array<i64: 4, 10>, scalar_prefetch = 1 : i64, scratch_operands = 1 : i64, tpu.core_type = #tpu.core_type<tc>, window_params = [{transform_indices = @transform_0, window_bounds = array<i64: 128, 256>}, {transform_indices = @transform_1, window_bounds = array<i64: 1, 256, 256>}, {transform_indices = @transform_2, window_bounds = array<i64: 1, 1, 256>}, {transform_indices = @transform_3, window_bounds = array<i64: 128, 256>}]} {
    %c0_i32 = arith.constant 0 : i32
    %0 = arith.cmpi eq, %arg1, %c0_i32 : i32
    %1 = arith.extui %0 : i1 to i32
    %c0_i32_0 = arith.constant 0 : i32
    %2 = arith.cmpi ne, %1, %c0_i32_0 : i32
    scf.if %2 {
      %c0_14 = arith.constant 0 : index
      %c0_15 = arith.constant 0 : index
      %23 = vector.load %arg3[%c0_14, %c0_15] : memref<128x256xf32, #tpu.memory_space<vmem>>, vector<128x256xf32>
      %24 = arith.truncf %23 : vector<128x256xf32> to vector<128x256xbf16>
      %c0_16 = arith.constant 0 : index
      %c0_17 = arith.constant 0 : index
      %25 = vector.load %arg7[%c0_16, %c0_17] : memref<128x256xbf16, #tpu.memory_space<vmem>>, vector<128x256xbf16>
      tpu.vector_store %arg7[%c0_16, %c0_17], %24 {strides = array<i32>} : memref<128x256xbf16, #tpu.memory_space<vmem>>, vector<128x256xbf16>,
    } else {
    }
    %c0 = arith.constant 0 : index
    %c0_1 = arith.constant 0 : index
    %3 = vector.load %arg7[%c0, %c0_1] : memref<128x256xbf16, #tpu.memory_space<vmem>>, vector<128x256xbf16>
    %c0_2 = arith.constant 0 : index
    %c0_3 = arith.constant 0 : index
    %c0_4 = arith.constant 0 : index
    %4 = vector.load %arg4[%c0_2, %c0_3, %c0_4] : memref<1x256x256xbf16, #tpu.memory_space<vmem>>, vector<1x256x256xbf16>
    %5 = vector.shape_cast %4 : vector<1x256x256xbf16> to vector<256x256xbf16>
    %cst = arith.constant dense<0.000000e+00> : vector<128x256xf32>
    %6 = tpu.matmul %3, %5, %cst {dimension_numbers = #tpu.dot_dimension_numbers<[1], [0], [0], [1], [0, 0, 1, 1], [], []>} : vector<128x256xbf16>, vector<256x256xbf16>, vector<128x256xf32> -> vector<128x256xf32>
    %c0_5 = arith.constant 0 : index
    %c0_6 = arith.constant 0 : index
    %c0_7 = arith.constant 0 : index
    %7 = vector.load %arg5[%c0_5, %c0_6, %c0_7] : memref<1x1x256xf32, #tpu.memory_space<vmem>>, vector<1x1x256xf32>
    %8 = vector.shape_cast %7 : vector<1x1x256xf32> to vector<1x256xf32>
    %9 = vector.broadcast %8 : vector<1x256xf32> to vector<128x256xf32>
    %10 = arith.addf %6, %9 : vector<128x256xf32>
    %11 = arith.index_cast %arg1 : i32 to index
    %12 = memref.load %arg2[%11] : memref<10xi32, #tpu.memory_space<smem>>
    %c0_i32_8 = arith.constant 0 : i32
    %13 = arith.cmpi ne, %12, %c0_i32_8 : i32
    %cst_9 = arith.constant 0.000000e+00 : f32
    %cst_10 = arith.constant 0xFF800000 : f32
    %14 = arith.select %13, %cst_9, %cst_10 : f32
    %15 = vector.broadcast %14 : f32 to vector<128x256xf32>
    %16 = arith.maximumf %10, %15 : vector<128x256xf32>
    %c9_i32 = arith.constant 9 : i32
    %17 = arith.cmpi slt, %arg1, %c9_i32 : i32
    %18 = arith.extui %17 : i1 to i32
    %c0_i32_11 = arith.constant 0 : i32
    %19 = arith.cmpi ne, %18, %c0_i32_11 : i32
    scf.if %19 {
      %23 = arith.truncf %16 : vector<128x256xf32> to vector<128x256xbf16>
      %c0_14 = arith.constant 0 : index
      %c0_15 = arith.constant 0 : index
      %24 = vector.load %arg7[%c0_14, %c0_15] : memref<128x256xbf16, #tpu.memory_space<vmem>>, vector<128x256xbf16>
      tpu.vector_store %arg7[%c0_14, %c0_15], %23 {strides = array<i32>} : memref<128x256xbf16, #tpu.memory_space<vmem>>, vector<128x256xbf16>,
    } else {
    }
    %c9_i32_12 = arith.constant 9 : i32
    %20 = arith.cmpi eq, %arg1, %c9_i32_12 : i32
    %21 = arith.extui %20 : i1 to i32
    %c0_i32_13 = arith.constant 0 : i32
    %22 = arith.cmpi ne, %21, %c0_i32_13 : i32
    scf.if %22 {
      %c0_14 = arith.constant 0 : index
      %c0_15 = arith.constant 0 : index
      %23 = vector.load %arg6[%c0_14, %c0_15] : memref<128x256xf32, #tpu.memory_space<vmem>>, vector<128x256xf32>
      tpu.vector_store %arg6[%c0_14, %c0_15], %16 {strides = array<i32>} : memref<128x256xf32, #tpu.memory_space<vmem>>, vector<128x256xf32>,
    } else {
    }
    return
  }
  func.func @transform_0(%arg0: i32, %arg1: i32, %arg2: memref<10xi32, #tpu.memory_space<smem>>) -> (i32, i32) {
    %c0_i32 = arith.constant 0 : i32
    %c0_i32_0 = arith.constant 0 : i32
    return %arg0, %c0_i32 : i32, i32
  }
  func.func @transform_1(%arg0: i32, %arg1: i32, %arg2: memref<10xi32, #tpu.memory_space<smem>>) -> (i32, i32, i32) {
    %c0_i32 = arith.constant 0 : i32
    %c0_i32_0 = arith.constant 0 : i32
    %c0_i32_1 = arith.constant 0 : i32
    return %arg1, %c0_i32, %c0_i32_0 : i32, i32, i32
  }
  func.func @transform_2(%arg0: i32, %arg1: i32, %arg2: memref<10xi32, #tpu.memory_space<smem>>) -> (i32, i32, i32) {
    %c0_i32 = arith.constant 0 : i32
    %c0_i32_0 = arith.constant 0 : i32
    %c0_i32_1 = arith.constant 0 : i32
    return %arg1, %c0_i32, %c0_i32_0 : i32, i32, i32
  }
  func.func @transform_3(%arg0: i32, %arg1: i32, %arg2: memref<10xi32, #tpu.memory_space<smem>>) -> (i32, i32) {
    %c0_i32 = arith.constant 0 : i32
    %c0_i32_0 = arith.constant 0 : i32
    return %arg0, %c0_i32 : i32, i32
  }
}

</mosaic_0001>

<llo_original>
// kernel: tpu_custom_call.1
$region0: #{tpu_custom_call.1}
  #allocation0 [shape = 'u32[]', space=smem, size = 0x4, offset = 0x4, fixed_abs, tag = 'smem constant byte address 0x4 - core index']
  #allocation1 [shape = 'u32[144,128]{1,0:T(1,128)}', space=vmem, size = 0x12000, scoped, tag = 'internal scratch']
  #allocation2 [shape = 'bf16[128,256]{1,0:T(16,128)(2,1)}', space=vmem, size = 0x10000, scoped, tag = 'scratch operand']
  #allocation3 [shape = 's32[1]{0}', space=sflag, size = 0x4, scoped, tag = 'scoped memory for tpu_custom_call.1']
  #allocation4 [shape = 'u8[512]{0}', space=smem, size = 0x200, scoped, tag = 'prefetched SMEM operand 0']
  %s0 = inlined_call_operand.hbm [shape: s32[10], index: 0, kind: input, shape index: {}]
  %s1 = inlined_call_operand.hbm [shape: f32[512,256], index: 1, kind: input, shape index: {}]
  %s2 = inlined_call_operand.hbm [shape: bf16[10,256,256], index: 2, kind: input, shape index: {}]
  %s3 = inlined_call_operand.hbm [shape: f32[10,1,256], index: 3, kind: input, shape index: {}]
  %s4 = inlined_call_operand.hbm [shape: f32[512,256], index: 4, kind: output, shape index: {}]
  %s5 = sld [smem:[#allocation0]]
  $region69: #{tpu_custom_call.1} parent=0
    _
  %s7 = ssub.s32 1, %s5
  %s8 = scalar_select 0, %s7, %s5
  %10 = dma.hbm_to_smem %s0, 16, [#allocation4], [#allocation3]
  %11 = dma.done [#allocation3], 16
  %12 = sfence
  $region1: #{tpu_custom_call.1} parent=0
    #allocation5 [shape = 'u8[262144]{0}', space=vmem, size = 0x40000, scoped, tag = 'input window, operand 1']
    #allocation6 [shape = 's32[2]{0}', space=sflag, size = 0x8, scoped, tag = 'scoped memory for tpu_custom_call.1']
    #allocation7 [shape = 's32[2]{0}', space=sflag, size = 0x8, scoped, tag = 'scoped memory for tpu_custom_call.1']
    #allocation8 [shape = 'u8[262144]{0}', space=vmem, size = 0x40000, scoped, tag = 'input window, operand 2']
    #allocation9 [shape = 's32[2]{0}', space=sflag, size = 0x8, scoped, tag = 'scoped memory for tpu_custom_call.1']
    #allocation10 [shape = 'u8[2048]{0}', space=vmem, size = 0x800, scoped, tag = 'input window, operand 3']
    #allocation11 [shape = 'u8[262144]{0}', space=vmem, size = 0x40000, scoped, tag = 'output window, operand 0']
    %13 = vsyncpa [#allocation6], 0
    %s14 = scalar_lea.sflag [#allocation6], 1
    %15 = vsyncpa %s14, 0
    %16 = vsyncpa [#allocation9], 0
    %s17 = scalar_lea.sflag [#allocation9], 1
    %18 = vsyncpa %s17, 0
    %19 = vsyncpa [#allocation7], 0
    %s20 = scalar_lea.sflag [#allocation7], 1
    %21 = vsyncpa %s20, 0
    loop: start=0, step=1, limit=42
    $region2: #{tpu_custom_call.1} parent=1 // loop_pre_header
      _
    $region3: #{tpu_custom_call.1} parent=1 // loop_header
      %s23 = sphi 0, %s27
      %p24 = scmp.ge.s32.totalorder %s23, 42
      %s30 = sphi 0, %s42
      %s31 = sphi 0, %s38
      %s32 = sphi 0, %s30
      %s33 = sphi 0, %s31
      %s34 = sphi 0, %s32
      %s35 = sphi 0, %s33
      %s45 = sphi 0, %s47
      %s48 = sphi 0, %s45
      %s49 = sphi 0, %s48
      %s65 = sphi 0, %s49
      %s71 = sphi 0, %s73
      %s74 = sphi 0, %s71
      %s75 = sphi 0, %s74
      %s91 = sphi 0, %s75
      %s97 = sphi 0, %s99
      %s100 = sphi 0, %s97
      %s101 = sphi 0, %s100
      %s117 = sphi 0, %s101
      %s123 = sphi 0, %s125
      %s126 = sphi 0, %s123
      %s127 = sphi 0, %s126
      %s143 = sphi 0, %s127
    $region4: #{tpu_custom_call.1} parent=1 // loop_header_branch
      %26 = sbr.rel (%p24) target = $region8
    $region5: #{tpu_custom_call.1} parent=1 // loop_body
      %s28 = ssub.s32 %s23, 1
      %s29 = ssub.s32 %s23, 2
      %s36 = sadd.s32 1, %s31
      %p37 = scmp.ge.s32.totalorder %s36, 10
      %s38 = scalar_select %p37, 0, %s36
      %s39 = sadd.s32 1, %s30
      %s40 = scalar_select %p37, %s39, %s30
      %p41 = scmp.ge.s32.totalorder %s40, 4
      %s42 = scalar_select %p41, 0, %s40
      %s43 = ssub.s32 %s30, %s42
      %p44 = scmp.eq.s32.totalorder %s43, 0
      %s46 = sadd.s32 %s45, 1
      %s47 = scalar_select %p44, %s45, %s46
      %p50 = pneg %p44
      %p51 = scmp.eq.s32.totalorder %s23, 39
      %p52 = por %p50, %p51
      %p53 = scmp.ne.s32.totalorder %s45, %s48
      %p54 = scmp.eq.s32.totalorder %s23, 0
      %p55 = por %p53, %p54
      %p56 = scmp.ne.s32.totalorder %s45, %s48
      %p57 = scmp.eq.s32.totalorder %s28, 39
      %p58 = por %p56, %p57
      %p59 = scmp.ne.s32.totalorder %s48, %s49
      %p60 = scmp.eq.s32.totalorder %s28, 0
      %p61 = por %p59, %p60
      %p62 = scmp.ne.s32.totalorder %s48, %s49
      %p63 = scmp.eq.s32.totalorder %s29, 39
      %p64 = por %p62, %p63
      %p66 = scmp.ne.s32.totalorder %s49, %s65
      %p67 = scmp.eq.s32.totalorder %s29, 0
      %p68 = por %p66, %p67
      %s69 = ssub.s32 %s31, %s38
      %p70 = scmp.eq.s32.totalorder %s69, 0
      %s72 = sadd.s32 %s71, 1
      %s73 = scalar_select %p70, %s71, %s72
      %p76 = pneg %p70
      %p77 = scmp.eq.s32.totalorder %s23, 39
      %p78 = por %p76, %p77
      %p79 = scmp.ne.s32.totalorder %s71, %s74
      %p80 = scmp.eq.s32.totalorder %s23, 0
      %p81 = por %p79, %p80
      %p82 = scmp.ne.s32.totalorder %s71, %s74
      %p83 = scmp.eq.s32.totalorder %s28, 39
      %p84 = por %p82, %p83
      %p85 = scmp.ne.s32.totalorder %s74, %s75
      %p86 = scmp.eq.s32.totalorder %s28, 0
      %p87 = por %p85, %p86
      %p88 = scmp.ne.s32.totalorder %s74, %s75
      %p89 = scmp.eq.s32.totalorder %s29, 39
      %p90 = por %p88, %p89
      %p92 = scmp.ne.s32.totalorder %s75, %s91
      %p93 = scmp.eq.s32.totalorder %s29, 0
      %p94 = por %p92, %p93
      %s95 = ssub.s32 %s31, %s38
      %p96 = scmp.eq.s32.totalorder %s95, 0
      %s98 = sadd.s32 %s97, 1
      %s99 = scalar_select %p96, %s97, %s98
      %p102 = pneg %p96
      %p103 = scmp.eq.s32.totalorder %s23, 39
      %p104 = por %p102, %p103
      %p105 = scmp.ne.s32.totalorder %s97, %s100
      %p106 = scmp.eq.s32.totalorder %s23, 0
      %p107 = por %p105, %p106
      %p108 = scmp.ne.s32.totalorder %s97, %s100
      %p109 = scmp.eq.s32.totalorder %s28, 39
      %p110 = por %p108, %p109
      %p111 = scmp.ne.s32.totalorder %s100, %s101
      %p112 = scmp.eq.s32.totalorder %s28, 0
      %p113 = por %p111, %p112
      %p114 = scmp.ne.s32.totalorder %s100, %s101
      %p115 = scmp.eq.s32.totalorder %s29, 39
      %p116 = por %p114, %p115
      %p118 = scmp.ne.s32.totalorder %s101, %s117
      %p119 = scmp.eq.s32.totalorder %s29, 0
      %p120 = por %p118, %p119
      %s121 = ssub.s32 %s30, %s42
      %p122 = scmp.eq.s32.totalorder %s121, 0
      %s124 = sadd.s32 %s123, 1
      %s125 = scalar_select %p122, %s123, %s124
      %p128 = pneg %p122
      %p129 = scmp.eq.s32.totalorder %s23, 39
      %p130 = por %p128, %p129
      %p131 = scmp.ne.s32.totalorder %s123, %s126
      %p132 = scmp.eq.s32.totalorder %s23, 0
      %p133 = por %p131, %p132
      %p134 = scmp.ne.s32.totalorder %s123, %s126
      %p135 = scmp.eq.s32.totalorder %s28, 39
      %p136 = por %p134, %p135
      %p137 = scmp.ne.s32.totalorder %s126, %s127
      %p138 = scmp.eq.s32.totalorder %s28, 0
      %p139 = por %p137, %p138
      %p140 = scmp.ne.s32.totalorder %s126, %s127
      %p141 = scmp.eq.s32.totalorder %s29, 39
      %p142 = por %p140, %p141
      %p144 = scmp.ne.s32.totalorder %s127, %s143
      %p145 = scmp.eq.s32.totalorder %s29, 0
      %p146 = por %p144, %p145
      %p147 = scmp.le.s32.totalorder 1, %s23
      %p148 = scmp.lt.s32.totalorder %s23, 41
      %p149 = pnand %p147, %p148
      %p150 = pneg %p149
      // Predicated region
      $region9: #{tpu_custom_call.1} parent=5 // pred_check
        _
      $region10: #{tpu_custom_call.1} parent=5 // pred_check_branch
        %152 = sbr.rel (%p149) target = $region12
      $region11: #{tpu_custom_call.1} parent=5 // pred_region
        %s153 = ssub.s32 %s23, 1
      $region12: #{tpu_custom_call.1} parent=5 // pred_fallthru
        _
      %p154 = scmp.lt.s32.totalorder %s23, 40
      // Predicated region
      $region13: #{tpu_custom_call.1} parent=5 // pred_check
        %p155 = pneg %p154
      $region14: #{tpu_custom_call.1} parent=5 // pred_check_branch
        %157 = sbr.rel (%p155) target = $region16
      $region15: #{tpu_custom_call.1} parent=5 // pred_region
        // Predicated region
        $region17: #{tpu_custom_call.1} parent=15 // pred_check
          %p158 = pneg %p55
        $region18: #{tpu_custom_call.1} parent=15 // pred_check_branch
          %160 = sbr.rel (%p158) target = $region20
        $region19: #{tpu_custom_call.1} parent=15 // pred_region
          %s161 = sand.u32 %s45, 1
          %s162 = scalar_lea.sflag [#allocation6], %s161
          %s163 = sand.u32 %s45, 1
          %s164 = smul.addr %s163, 256
          %s165 = scalar_lea.vmem [#allocation5], %s164
          %s166 = smul.u32 16, %s30
          %s168 = ssub.s32 4096, 4096
          %169 = vsyncadd %s162, %s168
          %s170 = smul.addr %s166, 2
          %s171 = smul.addr %s170, 128
          %s172 = scalar_lea.hbm %s1, %s171
          %s173 = sshll.u32 %s165, 4
          %s174 = int_to_ptr.vmem [resolvable:$true] %s173
          %179 = dma.hbm_to_vmem [thread:$0]  %s172, 4096, %s174, %s162, 256, 256, 16
        $region20: #{tpu_custom_call.1} parent=15 // pred_fallthru
          _
        // Predicated region
        $region21: #{tpu_custom_call.1} parent=15 // pred_check
          %p180 = pneg %p81
        $region22: #{tpu_custom_call.1} parent=15 // pred_check_branch
          %182 = sbr.rel (%p180) target = $region24
        $region23: #{tpu_custom_call.1} parent=15 // pred_region
          %s183 = sand.u32 %s23, 1
          %s184 = scalar_lea.sflag [#allocation9], %s183
          %s185 = sand.u32 %s71, 1
          %s186 = smul.addr %s185, 256
          %s187 = scalar_lea.vmem [#allocation8], %s186
          %s189 = ssub.s32 4096, 4096
          %190 = vsyncadd %s184, %s189
          %s191 = smul.addr %s31, 64
          %s192 = smul.addr %s191, 64
          %s193 = scalar_lea.hbm %s2, %s192
          %s194 = sshll.u32 %s187, 4
          %s195 = int_to_ptr.vmem [resolvable:$true] %s194
          %200 = dma.hbm_to_vmem [thread:$0]  %s193, 4096, %s195, %s184, 128, 128, 8
        $region24: #{tpu_custom_call.1} parent=15 // pred_fallthru
          _
        // Predicated region
        $region25: #{tpu_custom_call.1} parent=15 // pred_check
          %p201 = pneg %p107
        $region26: #{tpu_custom_call.1} parent=15 // pred_check_branch
          %203 = sbr.rel (%p201) target = $region28
        $region27: #{tpu_custom_call.1} parent=15 // pred_region
          %s204 = sand.u32 %s23, 1
          %s205 = scalar_lea.sflag [#allocation9], %s204
          %s206 = sand.u32 %s97, 1
          %s207 = smul.addr %s206, 2
          %s208 = scalar_lea.vmem [#allocation10], %s207
          %s210 = ssub.s32 32, 32
          %211 = vsyncadd %s205, %s210
          %s212 = smul.addr %s31, 2
          %s213 = smul.addr %s212, 16
          %s214 = scalar_lea.hbm %s3, %s213
          %s216 = sshll.u32 %s208, 4
          %s217 = int_to_ptr.vmem [resolvable:$true] %s216
          %219 = dma.hbm_to_vmem [thread:$0]  %s214, 32, %s217, %s205
        $region28: #{tpu_custom_call.1} parent=15 // pred_fallthru
          _
      $region16: #{tpu_custom_call.1} parent=5 // pred_fallthru
        _
      %p220 = scmp.le.s32.totalorder 1, %s23
      %p221 = scmp.lt.s32.totalorder %s23, 41
      %p222 = pnand %p220, %p221
      %p223 = pneg %p222
      // Predicated region
      $region29: #{tpu_custom_call.1} parent=5 // pred_check
        _
      $region30: #{tpu_custom_call.1} parent=5 // pred_check_branch
        %225 = sbr.rel (%p222) target = $region32
      $region31: #{tpu_custom_call.1} parent=5 // pred_region
        %s226 = ssub.s32 %s23, 1
        %s227 = sand.u32 %s48, 1
        %s228 = scalar_lea.sflag [#allocation6], %s227
        %s229 = sand.u32 %s48, 1
        %s230 = smul.addr %s229, 256
        %s231 = scalar_lea.vmem [#allocation5], %s230
        // Predicated region
        $region33: #{tpu_custom_call.1} parent=31 // pred_check
          %p232 = pneg %p61
        $region34: #{tpu_custom_call.1} parent=31 // pred_check_branch
          %234 = sbr.rel (%p232) target = $region36
        $region35: #{tpu_custom_call.1} parent=31 // pred_region
          %235 = dma.done %s228, 4096
        $region36: #{tpu_custom_call.1} parent=31 // pred_fallthru
          _
        %s236 = sand.u32 %s28, 1
        %s237 = scalar_lea.sflag [#allocation9], %s236
        %s238 = sand.u32 %s74, 1
        %s239 = smul.addr %s238, 256
        %s240 = scalar_lea.vmem [#allocation8], %s239
        // Predicated region
        $region37: #{tpu_custom_call.1} parent=31 // pred_check
          %p241 = pneg %p87
        $region38: #{tpu_custom_call.1} parent=31 // pred_check_branch
          %243 = sbr.rel (%p241) target = $region40
        $region39: #{tpu_custom_call.1} parent=31 // pred_region
          %244 = dma.done %s237, 4096
        $region40: #{tpu_custom_call.1} parent=31 // pred_fallthru
          _
        %s245 = sand.u32 %s28, 1
        %s246 = scalar_lea.sflag [#allocation9], %s245
        %s247 = sand.u32 %s100, 1
        %s248 = smul.addr %s247, 2
        %s249 = scalar_lea.vmem [#allocation10], %s248
        // Predicated region
        $region41: #{tpu_custom_call.1} parent=31 // pred_check
          %p250 = pneg %p113
        $region42: #{tpu_custom_call.1} parent=31 // pred_check_branch
          %252 = sbr.rel (%p250) target = $region44
        $region43: #{tpu_custom_call.1} parent=31 // pred_region
          %253 = dma.done %s246, 32
        $region44: #{tpu_custom_call.1} parent=31 // pred_fallthru
          _
        %s254 = sand.u32 %s48, 1
        %s255 = scalar_lea.sflag [#allocation6], %s254
        %s256 = sand.u32 %s48, 1
        %s257 = smul.addr %s256, 256
        %s258 = scalar_lea.vmem [#allocation5], %s257
        %p259 = pneg %p61
        %p260 = pneg %p58
        %s261 = sand.u32 %s28, 1
        %s262 = scalar_lea.sflag [#allocation9], %s261
        %s263 = sand.u32 %s74, 1
        %s264 = smul.addr %s263, 256
        %s265 = scalar_lea.vmem [#allocation8], %s264
        %p266 = pneg %p87
        %p267 = pneg %p84
        %s268 = sand.u32 %s28, 1
        %s269 = scalar_lea.sflag [#allocation9], %s268
        %s270 = sand.u32 %s100, 1
        %s271 = smul.addr %s270, 2
        %s272 = scalar_lea.vmem [#allocation10], %s271
        %p273 = pneg %p113
        %p274 = pneg %p110
        %p275 = pneg %p139
        %p276 = pneg %p136
        %s277 = sand.u32 %s126, 1
        %s278 = scalar_lea.sflag [#allocation7], %s277
        %s279 = sand.u32 %s126, 1
        %s280 = smul.addr %s279, 256
        %s281 = scalar_lea.vmem [#allocation11], %s280
        %s282 = smul.u32 16, %s32
        %s283 = smul.u32 16, %s32
        %p284 = scmp.eq.s32.totalorder %s33, 0
        // Predicated region
        $region45: #{tpu_custom_call.1} parent=31 // pred_check
          %p285 = pneg %p284
        $region46: #{tpu_custom_call.1} parent=31 // pred_check_branch
          %287 = sbr.rel (%p285) target = $region48
        $region47: #{tpu_custom_call.1} parent=31 // pred_region
          %v288 = vld [vmem:[%s231] sm:$0xff]
          %v289 = vld [vmem:[%s231 + $0x8] sm:$0xff]
          %v290 = vld [vmem:[%s231 + $0x10] sm:$0xff]
          %v291 = vld [vmem:[%s231 + $0x18] sm:$0xff]
          %v292 = vld [vmem:[%s231 + $0x20] sm:$0xff]
          %v293 = vld [vmem:[%s231 + $0x28] sm:$0xff]
          %v294 = vld [vmem:[%s231 + $0x30] sm:$0xff]
          %v295 = vld [vmem:[%s231 + $0x38] sm:$0xff]
          %v296 = vld [vmem:[%s231 + $0x40] sm:$0xff]
          %v297 = vld [vmem:[%s231 + $0x48] sm:$0xff]
          %v298 = vld [vmem:[%s231 + $0x50] sm:$0xff]
          %v299 = vld [vmem:[%s231 + $0x58] sm:$0xff]
          %v300 = vld [vmem:[%s231 + $0x60] sm:$0xff]
          %v301 = vld [vmem:[%s231 + $0x68] sm:$0xff]
          %v302 = vld [vmem:[%s231 + $0x70] sm:$0xff]
          %v303 = vld [vmem:[%s231 + $0x78] sm:$0xff]
          %v304 = vld [vmem:[%s231 + $0x80] sm:$0xff]
          %v305 = vld [vmem:[%s231 + $0x88] sm:$0xff]
          %v306 = vld [vmem:[%s231 + $0x90] sm:$0xff]
          %v307 = vld [vmem:[%s231 + $0x98] sm:$0xff]
          %v308 = vld [vmem:[%s231 + $0xa0] sm:$0xff]
          %v309 = vld [vmem:[%s231 + $0xa8] sm:$0xff]
          %v310 = vld [vmem:[%s231 + $0xb0] sm:$0xff]
          %v311 = vld [vmem:[%s231 + $0xb8] sm:$0xff]
          %v312 = vld [vmem:[%s231 + $0xc0] sm:$0xff]
          %v313 = vld [vmem:[%s231 + $0xc8] sm:$0xff]
          %v314 = vld [vmem:[%s231 + $0xd0] sm:$0xff]
          %v315 = vld [vmem:[%s231 + $0xd8] sm:$0xff]
          %v316 = vld [vmem:[%s231 + $0xe0] sm:$0xff]
          %v317 = vld [vmem:[%s231 + $0xe8] sm:$0xff]
          %v318 = vld [vmem:[%s231 + $0xf0] sm:$0xff]
          %v319 = vld [vmem:[%s231 + $0xf8] sm:$0xff]
          %v320 = vpack.c.bf16 %v290, %v288
          %v321 = vpack.c.bf16 %v291, %v289
          %v322 = vpack.c.bf16 %v294, %v292
          %v323 = vpack.c.bf16 %v295, %v293
          %v324 = vpack.c.bf16 %v298, %v296
          %v325 = vpack.c.bf16 %v299, %v297
          %v326 = vpack.c.bf16 %v302, %v300
          %v327 = vpack.c.bf16 %v303, %v301
          %v328 = vpack.c.bf16 %v306, %v304
          %v329 = vpack.c.bf16 %v307, %v305
          %v330 = vpack.c.bf16 %v310, %v308
          %v331 = vpack.c.bf16 %v311, %v309
          %v332 = vpack.c.bf16 %v314, %v312
          %v333 = vpack.c.bf16 %v315, %v313
          %v334 = vpack.c.bf16 %v318, %v316
          %v335 = vpack.c.bf16 %v319, %v317
          %336 = vst [vmem:[#allocation2] sm:$0xff] %v320
          %337 = vst [vmem:[#allocation2 + $0x8] sm:$0xff] %v321
          %338 = vst [vmem:[#allocation2 + $0x10] sm:$0xff] %v322
          %339 = vst [vmem:[#allocation2 + $0x18] sm:$0xff] %v323
          %340 = vst [vmem:[#allocation2 + $0x20] sm:$0xff] %v324
          %341 = vst [vmem:[#allocation2 + $0x28] sm:$0xff] %v325
          %342 = vst [vmem:[#allocation2 + $0x30] sm:$0xff] %v326
          %343 = vst [vmem:[#allocation2 + $0x38] sm:$0xff] %v327
          %344 = vst [vmem:[#allocation2 + $0x40] sm:$0xff] %v328
          %345 = vst [vmem:[#allocation2 + $0x48] sm:$0xff] %v329
          %346 = vst [vmem:[#allocation2 + $0x50] sm:$0xff] %v330
          %347 = vst [vmem:[#allocation2 + $0x58] sm:$0xff] %v331
          %348 = vst [vmem:[#allocation2 + $0x60] sm:$0xff] %v332
          %349 = vst [vmem:[#allocation2 + $0x68] sm:$0xff] %v333
          %350 = vst [vmem:[#allocation2 + $0x70] sm:$0xff] %v334
          %351 = vst [vmem:[#allocation2 + $0x78] sm:$0xff] %v335
        $region48: #{tpu_custom_call.1} parent=31 // pred_fallthru
          _
        %v352 = vld [vmem:[#allocation2] sm:$0xff]
        %v353 = vld [vmem:[#allocation2 + $0x8] sm:$0xff]
        %v354 = vld [vmem:[#allocation2 + $0x10] sm:$0xff]
        %v355 = vld [vmem:[#allocation2 + $0x18] sm:$0xff]
        %v356 = vld [vmem:[#allocation2 + $0x20] sm:$0xff]
        %v357 = vld [vmem:[#allocation2 + $0x28] sm:$0xff]
        %v358 = vld [vmem:[#allocation2 + $0x30] sm:$0xff]
        %v359 = vld [vmem:[#allocation2 + $0x38] sm:$0xff]
        %v360 = vld [vmem:[#allocation2 + $0x40] sm:$0xff]
        %v361 = vld [vmem:[#allocation2 + $0x48] sm:$0xff]
        %v362 = vld [vmem:[#allocation2 + $0x50] sm:$0xff]
        %v363 = vld [vmem:[#allocation2 + $0x58] sm:$0xff]
        %v364 = vld [vmem:[#allocation2 + $0x60] sm:$0xff]
        %v365 = vld [vmem:[#allocation2 + $0x68] sm:$0xff]
        %v366 = vld [vmem:[#allocation2 + $0x70] sm:$0xff]
        %v367 = vld [vmem:[#allocation2 + $0x78] sm:$0xff]
        %v368 = vld [vmem:[%s240] sm:$0xff]
        %v369 = vld [vmem:[%s240 + $0x8] sm:$0xff]
        %v370 = vld [vmem:[%s240 + $0x10] sm:$0xff]
        %v371 = vld [vmem:[%s240 + $0x18] sm:$0xff]
        %v372 = vld [vmem:[%s240 + $0x20] sm:$0xff]
        %v373 = vld [vmem:[%s240 + $0x28] sm:$0xff]
        %v374 = vld [vmem:[%s240 + $0x30] sm:$0xff]
        %v375 = vld [vmem:[%s240 + $0x38] sm:$0xff]
        %v376 = vld [vmem:[%s240 + $0x40] sm:$0xff]
        %v377 = vld [vmem:[%s240 + $0x48] sm:$0xff]
        %v378 = vld [vmem:[%s240 + $0x50] sm:$0xff]
        %v379 = vld [vmem:[%s240 + $0x58] sm:$0xff]
        %v380 = vld [vmem:[%s240 + $0x60] sm:$0xff]
        %v381 = vld [vmem:[%s240 + $0x68] sm:$0xff]
        %v382 = vld [vmem:[%s240 + $0x70] sm:$0xff]
        %v383 = vld [vmem:[%s240 + $0x78] sm:$0xff]
        %v384 = vld [vmem:[%s240 + $0x80] sm:$0xff]
        %v385 = vld [vmem:[%s240 + $0x88] sm:$0xff]
        %v386 = vld [vmem:[%s240 + $0x90] sm:$0xff]
        %v387 = vld [vmem:[%s240 + $0x98] sm:$0xff]
        %v388 = vld [vmem:[%s240 + $0xa0] sm:$0xff]
        %v389 = vld [vmem:[%s240 + $0xa8] sm:$0xff]
        %v390 = vld [vmem:[%s240 + $0xb0] sm:$0xff]
        %v391 = vld [vmem:[%s240 + $0xb8] sm:$0xff]
        %v392 = vld [vmem:[%s240 + $0xc0] sm:$0xff]
        %v393 = vld [vmem:[%s240 + $0xc8] sm:$0xff]
        %v394 = vld [vmem:[%s240 + $0xd0] sm:$0xff]
        %v395 = vld [vmem:[%s240 + $0xd8] sm:$0xff]
        %v396 = vld [vmem:[%s240 + $0xe0] sm:$0xff]
        %v397 = vld [vmem:[%s240 + $0xe8] sm:$0xff]
        %v398 = vld [vmem:[%s240 + $0xf0] sm:$0xff]
        %v399 = vld [vmem:[%s240 + $0xf8] sm:$0xff]
        %v400 = vld [vmem:[%s249] sm:$0x3]
        %v402 = vlaneseq
        %v403 = vshrl.u32 %v402, 7
        %v404 = vsub.s32 0, %v403
        %v405 = vrot.slane %v400, %v404
        %v406 = vlaneseq
        %v407 = vshrl.u32 %v406, 7
        %v408 = vsub.s32 1, %v407
        %v409 = vrot.slane %v400, %v408
        %v444 = vunpack.c.l.b16 %v368
        %v445 = vunpack.c.h.b16 %v368
        %v446 = vunpack.c.l.b16 %v369
        %v447 = vunpack.c.h.b16 %v369
        %v448 = vunpack.c.l.b16 %v370
        %v449 = vunpack.c.h.b16 %v370
        %v450 = vunpack.c.l.b16 %v371
        %v451 = vunpack.c.h.b16 %v371
        %v452 = vunpack.c.l.b16 %v372
        %v453 = vunpack.c.h.b16 %v372
        %v454 = vunpack.c.l.b16 %v373
        %v455 = vunpack.c.h.b16 %v373
        %v456 = vunpack.c.l.b16 %v374
        %v457 = vunpack.c.h.b16 %v374
        %v458 = vunpack.c.l.b16 %v375
        %v459 = vunpack.c.h.b16 %v375
        %v460 = vunpack.c.l.b16 %v376
        %v461 = vunpack.c.h.b16 %v376
        %v462 = vunpack.c.l.b16 %v377
        %v463 = vunpack.c.h.b16 %v377
        %v464 = vunpack.c.l.b16 %v378
        %v465 = vunpack.c.h.b16 %v378
        %v466 = vunpack.c.l.b16 %v379
        %v467 = vunpack.c.h.b16 %v379
        %v468 = vunpack.c.l.b16 %v380
        %v469 = vunpack.c.h.b16 %v380
        %v470 = vunpack.c.l.b16 %v381
        %v471 = vunpack.c.h.b16 %v381
        %v472 = vunpack.c.l.b16 %v382
        %v473 = vunpack.c.h.b16 %v382
        %v474 = vunpack.c.l.b16 %v383
        %v475 = vunpack.c.h.b16 %v383
        %v476 = vunpack.c.l.b16 %v384
        %v477 = vunpack.c.h.b16 %v384
        %v478 = vunpack.c.l.b16 %v385
        %v479 = vunpack.c.h.b16 %v385
        %v480 = vunpack.c.l.b16 %v386
        %v481 = vunpack.c.h.b16 %v386
        %v482 = vunpack.c.l.b16 %v387
        %v483 = vunpack.c.h.b16 %v387
        %v484 = vunpack.c.l.b16 %v388
        %v485 = vunpack.c.h.b16 %v388
        %v486 = vunpack.c.l.b16 %v389
        %v487 = vunpack.c.h.b16 %v389
        %v488 = vunpack.c.l.b16 %v390
        %v489 = vunpack.c.h.b16 %v390
        %v490 = vunpack.c.l.b16 %v391
        %v491 = vunpack.c.h.b16 %v391
        %v492 = vunpack.c.l.b16 %v392
        %v493 = vunpack.c.h.b16 %v392
        %v494 = vunpack.c.l.b16 %v393
        %v495 = vunpack.c.h.b16 %v393
        %v496 = vunpack.c.l.b16 %v394
        %v497 = vunpack.c.h.b16 %v394
        %v498 = vunpack.c.l.b16 %v395
        %v499 = vunpack.c.h.b16 %v395
        %v500 = vunpack.c.l.b16 %v396
        %v501 = vunpack.c.h.b16 %v396
        %v502 = vunpack.c.l.b16 %v397
        %v503 = vunpack.c.h.b16 %v397
        %v504 = vunpack.c.l.b16 %v398
        %v505 = vunpack.c.h.b16 %v398
        %v506 = vunpack.c.l.b16 %v399
        %v507 = vunpack.c.h.b16 %v399
        %v508 = vpack.c.b16 %v446, %v444
        %v509 = vpack.c.b16 %v447, %v445
        %v510 = vpack.c.b16 %v450, %v448
        %v511 = vpack.c.b16 %v451, %v449
        %v512 = vpack.c.b16 %v454, %v452
        %v513 = vpack.c.b16 %v455, %v453
        %v514 = vpack.c.b16 %v458, %v456
        %v515 = vpack.c.b16 %v459, %v457
        %v516 = vpack.c.b16 %v462, %v460
        %v517 = vpack.c.b16 %v463, %v461
        %v518 = vpack.c.b16 %v466, %v464
        %v519 = vpack.c.b16 %v467, %v465
        %v520 = vpack.c.b16 %v470, %v468
        %v521 = vpack.c.b16 %v471, %v469
        %v522 = vpack.c.b16 %v474, %v472
        %v523 = vpack.c.b16 %v475, %v473
        %v524 = vpack.c.b16 %v478, %v476
        %v525 = vpack.c.b16 %v479, %v477
        %v526 = vpack.c.b16 %v482, %v480
        %v527 = vpack.c.b16 %v483, %v481
        %v528 = vpack.c.b16 %v486, %v484
        %v529 = vpack.c.b16 %v487, %v485
        %v530 = vpack.c.b16 %v490, %v488
        %v531 = vpack.c.b16 %v491, %v489
        %v532 = vpack.c.b16 %v494, %v492
        %v533 = vpack.c.b16 %v495, %v493
        %v534 = vpack.c.b16 %v498, %v496
        %v535 = vpack.c.b16 %v499, %v497
        %v536 = vpack.c.b16 %v502, %v500
        %v537 = vpack.c.b16 %v503, %v501
        %v538 = vpack.c.b16 %v506, %v504
        %v539 = vpack.c.b16 %v507, %v505
        %572 = vmatprep.subr.bf16.mxu0 %v509
        %573 = vmatpush1.bf16.msra.mxu0 %v508
        %574 = vmatprep.subr.bf16.mxu0 %v511
        %575 = vmatpush1.bf16.msra.mxu0 %v510
        %576 = vmatprep.subr.bf16.mxu0 %v513
        %577 = vmatpush1.bf16.msra.mxu0 %v512
        %578 = vmatprep.subr.bf16.mxu0 %v515
        %579 = vmatpush1.bf16.msra.mxu0 %v514
        %580 = vmatprep.subr.bf16.mxu0 %v517
        %581 = vmatpush1.bf16.msra.mxu0 %v516
        %582 = vmatprep.subr.bf16.mxu0 %v519
        %583 = vmatpush1.bf16.msra.mxu0 %v518
        %584 = vmatprep.subr.bf16.mxu0 %v521
        %585 = vmatpush1.bf16.msra.mxu0 %v520
        %586 = vmatprep.subr.bf16.mxu0 %v523
        %587 = vmatpush1.bf16.msra.mxu0 %v522
        %588 = vmatprep.subr.bf16.mxu0 %v525
        %589 = vmatpush1.bf16.msra.mxu0 %v524
        %590 = vmatprep.subr.bf16.mxu0 %v527
        %591 = vmatpush1.bf16.msra.mxu0 %v526
        %592 = vmatprep.subr.bf16.mxu0 %v529
        %593 = vmatpush1.bf16.msra.mxu0 %v528
        %594 = vmatprep.subr.bf16.mxu0 %v531
        %595 = vmatpush1.bf16.msra.mxu0 %v530
        %596 = vmatprep.subr.bf16.mxu0 %v533
        %597 = vmatpush1.bf16.msra.mxu0 %v532
        %598 = vmatprep.subr.bf16.mxu0 %v535
        %599 = vmatpush1.bf16.msra.mxu0 %v534
        %600 = vmatprep.subr.bf16.mxu0 %v537
        %601 = vmatpush1.bf16.msra.mxu0 %v536
        %602 = vmatprep.subr.bf16.mxu0 %v539
        %603 = vmatpush1.bf16.msra.mxu0 %v538
        %604 = vmatprep.mubr.bf16.mxu0 %v353
        %605 = vmatmul.mubr.bf16.gmra.mrb[0].mxu0 %v352
        %v606 = vpop.f32.mrb[0].mxu0
        %v607 = vadd.f32 %v405, %v606
        %v608 = vpop.f32.mrb[0].mxu0
        %v609 = vadd.f32 %v409, %v608
        %v610 = vpop.f32.mrb[0].mxu0
        %v611 = vadd.f32 %v405, %v610
        %v612 = vpop.f32.mrb[0].mxu0
        %v613 = vadd.f32 %v409, %v612
        %614 = vmatprep.mubr.bf16.mxu0 %v355
        %615 = vmatmul.mubr.bf16.gmra.mrb[0].mxu0 %v354
        %v616 = vpop.f32.mrb[0].mxu0
        %v617 = vadd.f32 %v405, %v616
        %v618 = vpop.f32.mrb[0].mxu0
        %v619 = vadd.f32 %v409, %v618
        %v620 = vpop.f32.mrb[0].mxu0
        %v621 = vadd.f32 %v405, %v620
        %v622 = vpop.f32.mrb[0].mxu0
        %v623 = vadd.f32 %v409, %v622
        %624 = vmatprep.mubr.bf16.mxu0 %v357
        %625 = vmatmul.mubr.bf16.gmra.mrb[0].mxu0 %v356
        %v626 = vpop.f32.mrb[0].mxu0
        %v627 = vadd.f32 %v405, %v626
        %v628 = vpop.f32.mrb[0].mxu0
        %v629 = vadd.f32 %v409, %v628
        %v630 = vpop.f32.mrb[0].mxu0
        %v631 = vadd.f32 %v405, %v630
        %v632 = vpop.f32.mrb[0].mxu0
        %v633 = vadd.f32 %v409, %v632
        %634 = vmatprep.mubr.bf16.mxu0 %v359
        %635 = vmatmul.mubr.bf16.gmra.mrb[0].mxu0 %v358
        %v636 = vpop.f32.mrb[0].mxu0
        %v637 = vadd.f32 %v405, %v636
        %v638 = vpop.f32.mrb[0].mxu0
        %v639 = vadd.f32 %v409, %v638
        %v640 = vpop.f32.mrb[0].mxu0
        %v641 = vadd.f32 %v405, %v640
        %v642 = vpop.f32.mrb[0].mxu0
        %v643 = vadd.f32 %v409, %v642
        %644 = vmatprep.mubr.bf16.mxu0 %v361
        %645 = vmatmul.mubr.bf16.gmra.mrb[0].mxu0 %v360
        %v646 = vpop.f32.mrb[0].mxu0
        %v647 = vadd.f32 %v405, %v646
        %v648 = vpop.f32.mrb[0].mxu0
        %v649 = vadd.f32 %v409, %v648
        %v650 = vpop.f32.mrb[0].mxu0
        %v651 = vadd.f32 %v405, %v650
        %v652 = vpop.f32.mrb[0].mxu0
        %v653 = vadd.f32 %v409, %v652
        %654 = vmatprep.mubr.bf16.mxu0 %v363
        %655 = vmatmul.mubr.bf16.gmra.mrb[0].mxu0 %v362
        %v656 = vpop.f32.mrb[0].mxu0
        %v657 = vadd.f32 %v405, %v656
        %v658 = vpop.f32.mrb[0].mxu0
        %v659 = vadd.f32 %v409, %v658
        %v660 = vpop.f32.mrb[0].mxu0
        %v661 = vadd.f32 %v405, %v660
        %v662 = vpop.f32.mrb[0].mxu0
        %v663 = vadd.f32 %v409, %v662
        %664 = vmatprep.mubr.bf16.mxu0 %v365
        %665 = vmatmul.mubr.bf16.gmra.mrb[0].mxu0 %v364
        %v666 = vpop.f32.mrb[0].mxu0
        %v667 = vadd.f32 %v405, %v666
        %v668 = vpop.f32.mrb[0].mxu0
        %v669 = vadd.f32 %v409, %v668
        %v670 = vpop.f32.mrb[0].mxu0
        %v671 = vadd.f32 %v405, %v670
        %v672 = vpop.f32.mrb[0].mxu0
        %v673 = vadd.f32 %v409, %v672
        %674 = vmatprep.mubr.bf16.mxu0 %v367
        %675 = vmatmul.mubr.bf16.gmra.mrb[0].mxu0 %v366
        %v676 = vpop.f32.mrb[0].mxu0
        %v677 = vadd.f32 %v405, %v676
        %v678 = vpop.f32.mrb[0].mxu0
        %v679 = vadd.f32 %v409, %v678
        %v680 = vpop.f32.mrb[0].mxu0
        %v681 = vadd.f32 %v405, %v680
        %v682 = vpop.f32.mrb[0].mxu0
        %v683 = vadd.f32 %v409, %v682
        %684 = vdwg.mxu0
        %s685 = sld [smem:[#allocation4 + %s33]]
        %p686 = scmp.ne.s32.totalorder %s685, 0
        %s687 = scalar_select %p686, 0.0, -inf
        %v688 = vstv %s687
        %v689 = vmax.f32 %v607, %v688
        %v690 = vmax.f32 %v609, %v688
        %v691 = vmax.f32 %v611, %v688
        %v692 = vmax.f32 %v613, %v688
        %v693 = vmax.f32 %v617, %v688
        %v694 = vmax.f32 %v619, %v688
        %v695 = vmax.f32 %v621, %v688
        %v696 = vmax.f32 %v623, %v688
        %v697 = vmax.f32 %v627, %v688
        %v698 = vmax.f32 %v629, %v688
        %v699 = vmax.f32 %v631, %v688
        %v700 = vmax.f32 %v633, %v688
        %v701 = vmax.f32 %v637, %v688
        %v702 = vmax.f32 %v639, %v688
        %v703 = vmax.f32 %v641, %v688
        %v704 = vmax.f32 %v643, %v688
        %v705 = vmax.f32 %v647, %v688
        %v706 = vmax.f32 %v649, %v688
        %v707 = vmax.f32 %v651, %v688
        %v708 = vmax.f32 %v653, %v688
        %v709 = vmax.f32 %v657, %v688
        %v710 = vmax.f32 %v659, %v688
        %v711 = vmax.f32 %v661, %v688
        %v712 = vmax.f32 %v663, %v688
        %v713 = vmax.f32 %v667, %v688
        %v714 = vmax.f32 %v669, %v688
        %v715 = vmax.f32 %v671, %v688
        %v716 = vmax.f32 %v673, %v688
        %v717 = vmax.f32 %v677, %v688
        %v718 = vmax.f32 %v679, %v688
        %v719 = vmax.f32 %v681, %v688
        %v720 = vmax.f32 %v683, %v688
        %p721 = scmp.lt.s32.totalorder %s33, 9
        // Predicated region
        $region49: #{tpu_custom_call.1} parent=31 // pred_check
          %p722 = pneg %p721
        $region50: #{tpu_custom_call.1} parent=31 // pred_check_branch
          %724 = sbr.rel (%p722) target = $region52
        $region51: #{tpu_custom_call.1} parent=31 // pred_region
          %v725 = vpack.c.bf16 %v691, %v689
          %v726 = vpack.c.bf16 %v692, %v690
          %v727 = vpack.c.bf16 %v695, %v693
          %v728 = vpack.c.bf16 %v696, %v694
          %v729 = vpack.c.bf16 %v699, %v697
          %v730 = vpack.c.bf16 %v700, %v698
          %v731 = vpack.c.bf16 %v703, %v701
          %v732 = vpack.c.bf16 %v704, %v702
          %v733 = vpack.c.bf16 %v707, %v705
          %v734 = vpack.c.bf16 %v708, %v706
          %v735 = vpack.c.bf16 %v711, %v709
          %v736 = vpack.c.bf16 %v712, %v710
          %v737 = vpack.c.bf16 %v715, %v713
          %v738 = vpack.c.bf16 %v716, %v714
          %v739 = vpack.c.bf16 %v719, %v717
          %v740 = vpack.c.bf16 %v720, %v718
          %741 = vst [vmem:[#allocation2] sm:$0xff] %v725
          %742 = vst [vmem:[#allocation2 + $0x8] sm:$0xff] %v726
          %743 = vst [vmem:[#allocation2 + $0x10] sm:$0xff] %v727
          %744 = vst [vmem:[#allocation2 + $0x18] sm:$0xff] %v728
          %745 = vst [vmem:[#allocation2 + $0x20] sm:$0xff] %v729
          %746 = vst [vmem:[#allocation2 + $0x28] sm:$0xff] %v730
          %747 = vst [vmem:[#allocation2 + $0x30] sm:$0xff] %v731
          %748 = vst [vmem:[#allocation2 + $0x38] sm:$0xff] %v732
          %749 = vst [vmem:[#allocation2 + $0x40] sm:$0xff] %v733
          %750 = vst [vmem:[#allocation2 + $0x48] sm:$0xff] %v734
          %751 = vst [vmem:[#allocation2 + $0x50] sm:$0xff] %v735
          %752 = vst [vmem:[#allocation2 + $0x58] sm:$0xff] %v736
          %753 = vst [vmem:[#allocation2 + $0x60] sm:$0xff] %v737
          %754 = vst [vmem:[#allocation2 + $0x68] sm:$0xff] %v738
          %755 = vst [vmem:[#allocation2 + $0x70] sm:$0xff] %v739
          %756 = vst [vmem:[#allocation2 + $0x78] sm:$0xff] %v740
        $region52: #{tpu_custom_call.1} parent=31 // pred_fallthru
          _
        %p757 = scmp.eq.s32.totalorder %s33, 9
        // Predicated region
        $region53: #{tpu_custom_call.1} parent=31 // pred_check
          %p758 = pneg %p757
        $region54: #{tpu_custom_call.1} parent=31 // pred_check_branch
          %760 = sbr.rel (%p758) target = $region56
        $region55: #{tpu_custom_call.1} parent=31 // pred_region
          %761 = vst [vmem:[%s281] sm:$0xff] %v689
          %762 = vst [vmem:[%s281 + $0x8] sm:$0xff] %v690
          %763 = vst [vmem:[%s281 + $0x10] sm:$0xff] %v691
          %764 = vst [vmem:[%s281 + $0x18] sm:$0xff] %v692
          %765 = vst [vmem:[%s281 + $0x20] sm:$0xff] %v693
          %766 = vst [vmem:[%s281 + $0x28] sm:$0xff] %v694
          %767 = vst [vmem:[%s281 + $0x30] sm:$0xff] %v695
          %768 = vst [vmem:[%s281 + $0x38] sm:$0xff] %v696
          %769 = vst [vmem:[%s281 + $0x40] sm:$0xff] %v697
          %770 = vst [vmem:[%s281 + $0x48] sm:$0xff] %v698
          %771 = vst [vmem:[%s281 + $0x50] sm:$0xff] %v699
          %772 = vst [vmem:[%s281 + $0x58] sm:$0xff] %v700
          %773 = vst [vmem:[%s281 + $0x60] sm:$0xff] %v701
          %774 = vst [vmem:[%s281 + $0x68] sm:$0xff] %v702
          %775 = vst [vmem:[%s281 + $0x70] sm:$0xff] %v703
          %776 = vst [vmem:[%s281 + $0x78] sm:$0xff] %v704
          %777 = vst [vmem:[%s281 + $0x80] sm:$0xff] %v705
          %778 = vst [vmem:[%s281 + $0x88] sm:$0xff] %v706
          %779 = vst [vmem:[%s281 + $0x90] sm:$0xff] %v707
          %780 = vst [vmem:[%s281 + $0x98] sm:$0xff] %v708
          %781 = vst [vmem:[%s281 + $0xa0] sm:$0xff] %v709
          %782 = vst [vmem:[%s281 + $0xa8] sm:$0xff] %v710
          %783 = vst [vmem:[%s281 + $0xb0] sm:$0xff] %v711
          %784 = vst [vmem:[%s281 + $0xb8] sm:$0xff] %v712
          %785 = vst [vmem:[%s281 + $0xc0] sm:$0xff] %v713
          %786 = vst [vmem:[%s281 + $0xc8] sm:$0xff] %v714
          %787 = vst [vmem:[%s281 + $0xd0] sm:$0xff] %v715
          %788 = vst [vmem:[%s281 + $0xd8] sm:$0xff] %v716
          %789 = vst [vmem:[%s281 + $0xe0] sm:$0xff] %v717
          %790 = vst [vmem:[%s281 + $0xe8] sm:$0xff] %v718
          %791 = vst [vmem:[%s281 + $0xf0] sm:$0xff] %v719
          %792 = vst [vmem:[%s281 + $0xf8] sm:$0xff] %v720
        $region56: #{tpu_custom_call.1} parent=31 // pred_fallthru
          _
        %s793 = sand.u32 %s126, 1
        %s794 = scalar_lea.sflag [#allocation7], %s793
        %s795 = sand.u32 %s126, 1
        %s796 = smul.addr %s795, 256
        %s797 = scalar_lea.vmem [#allocation11], %s796
        // Predicated region
        $region57: #{tpu_custom_call.1} parent=31 // pred_check
          %p798 = pneg %p136
        $region58: #{tpu_custom_call.1} parent=31 // pred_check_branch
          %800 = sbr.rel (%p798) target = $region60
        $region59: #{tpu_custom_call.1} parent=31 // pred_region
          %s801 = smul.u32 16, %s32
          %s803 = ssub.s32 4096, 4096
          %804 = vsyncadd %s794, %s803
          %s805 = smul.addr %s801, 2
          %s806 = smul.addr %s805, 128
          %s807 = scalar_lea.hbm %s4, %s806
          %s808 = sshll.u32 %s797, 4
          %s809 = int_to_ptr.vmem [resolvable:$true] %s808
          %814 = dma.vmem_to_hbm [thread:$0]  %s809, 4096, %s807, %s794, 256, 256, 16
        $region60: #{tpu_custom_call.1} parent=31 // pred_fallthru
          _
      $region32: #{tpu_custom_call.1} parent=5 // pred_fallthru
        _
      %p815 = scmp.le.s32.totalorder 2, %s23
      // Predicated region
      $region61: #{tpu_custom_call.1} parent=5 // pred_check
        %p816 = pneg %p815
      $region62: #{tpu_custom_call.1} parent=5 // pred_check_branch
        %818 = sbr.rel (%p816) target = $region64
      $region63: #{tpu_custom_call.1} parent=5 // pred_region
        %s819 = ssub.s32 %s23, 2
        // Predicated region
        $region65: #{tpu_custom_call.1} parent=63 // pred_check
          %p820 = pneg %p142
        $region66: #{tpu_custom_call.1} parent=63 // pred_check_branch
          %822 = sbr.rel (%p820) target = $region68
        $region67: #{tpu_custom_call.1} parent=63 // pred_region
          %s823 = sand.u32 %s127, 1
          %s824 = scalar_lea.sflag [#allocation7], %s823
          %s825 = sand.u32 %s127, 1
          %s826 = smul.addr %s825, 256
          %s827 = scalar_lea.vmem [#allocation11], %s826
          %828 = dma.done %s824, 4096
        $region68: #{tpu_custom_call.1} parent=63 // pred_fallthru
          _
      $region64: #{tpu_custom_call.1} parent=5 // pred_fallthru
        _
    $region6: #{tpu_custom_call.1} parent=1 // loop_footer
      %s27 = sadd.s32 1, %s23
    $region7: #{tpu_custom_call.1} parent=1 // loop_footer_branch
      %22 = sbr.rel target = $region3
    $region8: #{tpu_custom_call.1} parent=1 // loop_exit
      _
    %829 = vsyncpa [#allocation6], 1
    %s830 = scalar_lea.sflag [#allocation6], 1
    %831 = vsyncpa %s830, 1
    %832 = vsyncpa [#allocation9], 1
    %s833 = scalar_lea.sflag [#allocation9], 1
    %834 = vsyncpa %s833, 1
    %835 = vsyncpa [#allocation7], 1
    %s836 = scalar_lea.sflag [#allocation7], 1
    %837 = vsyncpa %s836, 1

</llo_original>
